<compile_context>
chip_gen: v5e
topology: v5e:2x2
jax: 0.10.0
libtpu: 0.0.40
codegen_flags: <defaults>
</compile_context>

<pallas_src>
import functools

import jax
import jax.numpy as jnp
from jax.experimental import pallas as pl
from jax.experimental.pallas import tpu as pltpu

LANE = 128


def _round_up(x, m):
    return pl.cdiv(x, m) * m


def _vmem_budget_bytes():
    """Generation-aware VMEM budget: ~75% of physical per-core VMEM.

    v5e/v6e (128 MiB) -> ~96 MiB, v7x (64 MiB) -> ~48 MiB.  Falls back to a
    conservative 48 MiB (safe on every generation) if the query fails."""
    cap = None
    try:
        cap = getattr(pltpu.get_tpu_info(), "vmem_capacity_bytes", None)
    except Exception:
        cap = None
    if cap is None:
        cap = 64 * 1024 * 1024
    return int(cap * 3 // 4)


def prepare_highway_params(wn, bn, wg, bg, lane=LANE):
    """Pad, fuse and cast the weights ONCE (hoisted out of the forward path).

    wn/wg: (L, H, H) stored as (in, out) -- i.e. already transposed vs the
    PyTorch (out, in) layout so the kernel computes x @ W.  bn/bg: (L, H).

    Returns (w_cat, b_cat, H) with
      w_cat: (L, Hp, 2*Hp) bf16, [:, :, :Hp] = Wn, [:, :, Hp:] = Wg
      b_cat: (L, 1, 2*Hp)  f32,  same layout
    Padded rows/cols are zero (required for the padding invariant)."""
    L, H, H2 = wn.shape
    assert H == H2
    Hp = _round_up(H, lane)
    w_cat = jnp.zeros((L, Hp, 2 * Hp), jnp.bfloat16)
    w_cat = w_cat.at[:, :H, :H].set(wn.astype(jnp.bfloat16))
    w_cat = w_cat.at[:, :H, Hp:Hp + H].set(wg.astype(jnp.bfloat16))
    b_cat = jnp.zeros((L, 1, 2 * Hp), jnp.float32)
    b_cat = b_cat.at[:, 0, :H].set(bn.astype(jnp.float32))
    b_cat = b_cat.at[:, 0, Hp:Hp + H].set(bg.astype(jnp.float32))
    return w_cat, b_cat, H


def _sigmoid_eup(z):
    # sigmoid(z) == 0.5*(tanh(z/2)+1); tanh lives on the EUP slot, no divide.
    return 0.5 * (jnp.tanh(0.5 * z) + 1.0)


def _highway_kernel_resident(x_ref, w_ref, b_ref, o_ref, *, n_layers, hp):
    """All-layers-resident path.

    x_ref: (tm, Hp) f32      w_ref: (L, Hp, 2*Hp) bf16, VMEM-resident
    b_ref: (L, 1, 2*Hp) f32  o_ref: (tm, Hp)
    """
    x = x_ref[...].astype(jnp.float32)
    for l in range(n_layers):            # small static loop, unrolled at trace
        x_lo = x.astype(jnp.bfloat16)    # bf16 MXU operands, f32 accumulation
        y = jnp.dot(x_lo, w_ref[l], preferred_element_type=jnp.float32)
        y = y + b_ref[l]
        h = jnp.maximum(y[:, :hp], 0.0)            # relu (normal half)
        g = _sigmoid_eup(y[:, hp:])                # gate half
        x = x + g * (h - x)              # == g*h + (1-g)*x, one fewer VPU op
    o_ref[...] = x.astype(o_ref.dtype)


def _highway_kernel_stream(x_ref, w_ref, b_ref, o_ref, acc_ref, *, hp):
    """Layer-streaming fallback: grid axis 1 runs over layers, x carried in a
    VMEM scratch.  Per-layer weight blocks are double-buffered so the next
    layer's DMA overlaps this layer's matmul.

    x_ref: (tm, Hp)         w_ref: (1, Hp, 2*Hp) bf16 (layer l)
    b_ref: (1, 1, 2*Hp)     o_ref: (tm, Hp)      acc_ref: (tm, Hp) f32
    """
    l = pl.program_id(1)

    @pl.when(l == 0)
    def _():
        acc_ref[...] = x_ref[...].astype(jnp.float32)

    x = acc_ref[...]
    x_lo = x.astype(jnp.bfloat16)
    y = jnp.dot(x_lo, w_ref[0], preferred_element_type=jnp.float32)
    y = y + b_ref[0]
    h = jnp.maximum(y[:, :hp], 0.0)
    g = _sigmoid_eup(y[:, hp:])
    x = x + g * (h - x)
    acc_ref[...] = x

    @pl.when(l == pl.num_programs(1) - 1)
    def _():
        o_ref[...] = x.astype(o_ref.dtype)


def highway_forward(x, w_cat, b_cat, h_features, *, tm=None,
                    force_layer_stream=False):
    """x: (..., H).  w_cat/b_cat from prepare_highway_params."""
    orig_shape = x.shape
    H = h_features
    assert orig_shape[-1] == H
    L, Hp, Hp2 = w_cat.shape
    assert Hp2 == 2 * Hp

    x2d = x.reshape(-1, H)
    M = x2d.shape[0]

    budget = _vmem_budget_bytes()

    # Row tile: MXU-aligned (multiple of 128), never larger than the padded
    # row count; target 512 on 128-MiB-VMEM chips (v5e/v6e), 256 on v7x.
    target = tm if tm is not None else (512 if budget >= 90 * 1024 * 1024
                                        else 256)
    tm = min(_round_up(target, LANE), _round_up(M, LANE))
    Mp = _round_up(M, tm)

    # Path selection: resident weights if weights + double-buffered I/O +
    # f32 intermediates fit comfortably under the per-core budget.
    weight_bytes = w_cat.size * 2 + b_cat.size * 4
    io_bytes = 2 * 2 * tm * Hp * 4                  # in + out, double-buffered
    interm_bytes = 5 * tm * Hp * 4                  # x, y halves, h/g temps
    use_stream = force_layer_stream or (
        weight_bytes + io_bytes + interm_bytes > int(budget * 0.8))

    # Pad activations only if needed; single jnp.pad, no fresh zero buffer.
    x_p = x2d if (M, H) == (Mp, Hp) else jnp.pad(x2d, ((0, Mp - M),
                                                       (0, Hp - H)))

    if not use_stream:
        kernel = functools.partial(_highway_kernel_resident, n_layers=L, hp=Hp)
        cost = pl.CostEstimate(
            flops=4 * L * Mp * Hp * Hp,                    # fused (Hp,2Hp) dot
            transcendentals=L * Mp * Hp,                   # tanh (sigmoid)
            bytes_accessed=(2 * Mp * Hp * 4                # x in + out (f32)
                            + L * Hp * 2 * Hp * 2          # bf16 fused weights
                            + L * 2 * Hp * 4))             # f32 fused biases

        # Weights / biases never change across the grid -> single-buffered,
        # VMEM-resident (constant index_map).
        def const_spec(shape):
            return pl.BlockSpec(shape, lambda i: (0, 0, 0),
                                pipeline_mode=pl.Buffered(1))

        out = pl.pallas_call(
            kernel,
            out_shape=jax.ShapeDtypeStruct((Mp, Hp), x.dtype),
            grid_spec=pltpu.PrefetchScalarGridSpec(
                num_scalar_prefetch=0,
                grid=(Mp // tm,),
                in_specs=[
                    pl.BlockSpec((tm, Hp), lambda i: (i, 0)),   # x (streamed)
                    const_spec((L, Hp, 2 * Hp)),                # W_cat
                    const_spec((L, 1, 2 * Hp)),                 # b_cat
                ],
                out_specs=pl.BlockSpec((tm, Hp), lambda i: (i, 0)),
            ),
            compiler_params=pltpu.CompilerParams(
                dimension_semantics=("parallel",),
                vmem_limit_bytes=budget),
            cost_estimate=cost,
        )(x_p, w_cat, b_cat)
    else:
        kernel = functools.partial(_highway_kernel_stream, hp=Hp)
        n_tiles = Mp // tm
        cost = pl.CostEstimate(
            flops=4 * L * Mp * Hp * Hp,
            transcendentals=L * Mp * Hp,
            bytes_accessed=(L * Mp * Hp * 4 + Mp * Hp * 4
                            + n_tiles * L * (Hp * 2 * Hp * 2 + 2 * Hp * 4)))
        out = pl.pallas_call(
            kernel,
            out_shape=jax.ShapeDtypeStruct((Mp, Hp), x.dtype),
            grid_spec=pltpu.PrefetchScalarGridSpec(
                num_scalar_prefetch=0,
                grid=(n_tiles, L),
                in_specs=[
                    pl.BlockSpec((tm, Hp), lambda i, l: (i, 0)),        # x
                    pl.BlockSpec((1, Hp, 2 * Hp), lambda i, l: (l, 0, 0)),
                    pl.BlockSpec((1, 1, 2 * Hp), lambda i, l: (l, 0, 0)),
                ],
                out_specs=pl.BlockSpec((tm, Hp), lambda i, l: (i, 0)),
                scratch_shapes=[pltpu.VMEM((tm, Hp), jnp.float32)],
            ),
            compiler_params=pltpu.CompilerParams(
                dimension_semantics=("parallel", "arbitrary"),
                vmem_limit_bytes=budget),
            cost_estimate=cost,
        )(x_p, w_cat, b_cat)

    return out[:M, :H].reshape(orig_shape)


def highway_reference(x, wn, bn, wg, bg):
    """Pure-JAX f32 reference matching the PyTorch module semantics."""
    L = wn.shape[0]
    for l in range(L):
        h = jax.nn.relu(x @ wn[l] + bn[l])
        g = jax.nn.sigmoid(x @ wg[l] + bg[l])
        x = g * h + (1.0 - g) * x
    return x


def highway_reference_bf16(x, wn, bn, wg, bg):
    """Reference with the kernel's bf16-operand / f32-accumulate precision."""
    L = wn.shape[0]
    x = x.astype(jnp.float32)
    for l in range(L):
        xl = x.astype(jnp.bfloat16)
        h = jax.nn.relu(
            jnp.dot(xl, wn[l].astype(jnp.bfloat16),
                    preferred_element_type=jnp.float32) + bn[l])
        g = jax.nn.sigmoid(
            jnp.dot(xl, wg[l].astype(jnp.bfloat16),
                    preferred_element_type=jnp.float32) + bg[l])
        x = x + g * (h - x)
    return x


def init_params(key, n_layers, in_size, dtype=jnp.float32):
    """Deterministic init mimicking nn.Linear default (uniform +/- 1/sqrt(in)).

    Weights stored as (in, out) so the kernel computes x @ W (equivalent to
    PyTorch's x @ W_torch.T with W_torch of shape (out, in))."""
    bound = 1.0 / jnp.sqrt(in_size)
    keys = jax.random.split(key, 4)
    wn = jax.random.uniform(keys[0], (n_layers, in_size, in_size),
                            dtype, -bound, bound)
    bn = jax.random.uniform(keys[1], (n_layers, in_size),
                            dtype, -bound, bound)
    wg = jax.random.uniform(keys[2], (n_layers, in_size, in_size),
                            dtype, -bound, bound)
    bg = jax.random.uniform(keys[3], (n_layers, in_size),
                            dtype, -bound, bound)
    return wn, bn, wg, bg


if __name__ == "__main__":
    batch, seq, in_size = 2, 8, 32
    hw_n_layers = 2

    key = jax.random.PRNGKey(0)
    k_x, k_p = jax.random.split(key)

    x = jax.random.normal(k_x, (batch, seq, in_size), dtype=jnp.float32)
    wn, bn, wg, bg = init_params(k_p, hw_n_layers, in_size)

    # Weight fusion / padding / bf16 cast done once, outside the forward path.
    w_cat, b_cat, H = prepare_highway_params(wn, bn, wg, bg)

    out = highway_forward(x, w_cat, b_cat, H)
    out = jax.block_until_ready(out)
    assert out.shape == x.shape and out.dtype == x.dtype

    ref_bf16 = highway_reference_bf16(x, wn, bn, wg, bg)
    ref_f32 = highway_reference(x, wn, bn, wg, bg)

    # Tight check vs matched-precision reference, loose check vs full f32.
    assert jnp.allclose(out, ref_bf16, atol=2e-3, rtol=2e-3), \
        "mismatch vs matched-precision reference (resident path)"
    assert jnp.allclose(out, ref_f32, atol=5e-2, rtol=5e-2), \
        "mismatch vs f32 reference (resident path)"

    # Also exercise the layer-streaming fallback (used when L*Hp^2 weights do
    # not fit the per-core VMEM budget, e.g. large models on v7x).
    out_stream = highway_forward(x, w_cat, b_cat, H, force_layer_stream=True)
    out_stream = jax.block_until_ready(out_stream)
    assert jnp.allclose(out_stream, ref_bf16, atol=2e-3, rtol=2e-3), \
        "mismatch vs matched-precision reference (stream path)"

    print("KERNEL_OK")
</pallas_src>

<mosaic_0001>
module attributes {stable_mosaic.version = 11 : i64} {
  func.func @_highway_kernel_resident(%arg0: i32, %arg1: memref<128x128xf32, #tpu.memory_space<vmem>>, %arg2: memref<2x128x256xbf16, #tpu.memory_space<vmem>>, %arg3: memref<2x1x256xf32, #tpu.memory_space<vmem>>, %arg4: memref<128x128xf32, #tpu.memory_space<vmem>>) attributes {dimension_semantics = [#tpu.dimension_semantics<parallel>], iteration_bounds = array<i64: 1>, scalar_prefetch = 0 : i64, scratch_operands = 0 : i64, tpu.core_type = #tpu.core_type<tc>, window_params = [{transform_indices = @transform_0, window_bounds = array<i64: 128, 128>}, {pipeline_mode = #tpu.pipeline_mode<synchronous>, transform_indices = @transform_1, window_bounds = array<i64: 2, 128, 256>}, {pipeline_mode = #tpu.pipeline_mode<synchronous>, transform_indices = @transform_2, window_bounds = array<i64: 2, 1, 256>}, {transform_indices = @transform_3, window_bounds = array<i64: 128, 128>}]} {
    %c0 = arith.constant 0 : index
    %c0_0 = arith.constant 0 : index
    %0 = vector.load %arg1[%c0, %c0_0] : memref<128x128xf32, #tpu.memory_space<vmem>>, vector<128x128xf32>
    %1 = arith.truncf %0 : vector<128x128xf32> to vector<128x128xbf16>
    %c0_1 = arith.constant 0 : index
    %c0_2 = arith.constant 0 : index
    %c0_3 = arith.constant 0 : index
    %2 = vector.load %arg2[%c0_1, %c0_2, %c0_3] : memref<2x128x256xbf16, #tpu.memory_space<vmem>>, vector<1x128x256xbf16>
    %3 = vector.shape_cast %2 : vector<1x128x256xbf16> to vector<128x256xbf16>
    %cst = arith.constant dense<0.000000e+00> : vector<128x256xf32>
    %4 = tpu.matmul %1, %3, %cst {dimension_numbers = #tpu.dot_dimension_numbers<[1], [0], [0], [1], [0, 0, 1, 1], [], []>} : vector<128x128xbf16>, vector<128x256xbf16>, vector<128x256xf32> -> vector<128x256xf32>
    %c0_4 = arith.constant 0 : index
    %c0_5 = arith.constant 0 : index
    %c0_6 = arith.constant 0 : index
    %5 = vector.load %arg3[%c0_4, %c0_5, %c0_6] : memref<2x1x256xf32, #tpu.memory_space<vmem>>, vector<1x1x256xf32>
    %6 = vector.shape_cast %5 : vector<1x1x256xf32> to vector<1x256xf32>
    %7 = vector.broadcast %6 : vector<1x256xf32> to vector<128x256xf32>
    %8 = arith.addf %4, %7 : vector<128x256xf32>
    %9 = vector.extract_strided_slice %8 {offsets = [0, 0], sizes = [128, 128], strides = [1, 1]} : vector<128x256xf32> to vector<128x128xf32>
    %cst_7 = arith.constant 0.000000e+00 : f32
    %10 = vector.broadcast %cst_7 : f32 to vector<128x128xf32>
    %11 = arith.maximumf %9, %10 : vector<128x128xf32>
    %12 = vector.extract_strided_slice %8 {offsets = [0, 128], sizes = [128, 128], strides = [1, 1]} : vector<128x256xf32> to vector<128x128xf32>
    %cst_8 = arith.constant 5.000000e-01 : f32
    %13 = vector.broadcast %cst_8 : f32 to vector<128x128xf32>
    %14 = arith.mulf %13, %12 : vector<128x128xf32>
    %15 = math.tanh %14 : vector<128x128xf32>
    %cst_9 = arith.constant 1.000000e+00 : f32
    %16 = vector.broadcast %cst_9 : f32 to vector<128x128xf32>
    %17 = arith.addf %15, %16 : vector<128x128xf32>
    %cst_10 = arith.constant 5.000000e-01 : f32
    %18 = vector.broadcast %cst_10 : f32 to vector<128x128xf32>
    %19 = arith.mulf %18, %17 : vector<128x128xf32>
    %20 = arith.subf %11, %0 : vector<128x128xf32>
    %21 = arith.mulf %19, %20 : vector<128x128xf32>
    %22 = arith.addf %0, %21 : vector<128x128xf32>
    %23 = arith.truncf %22 : vector<128x128xf32> to vector<128x128xbf16>
    %c1 = arith.constant 1 : index
    %c0_11 = arith.constant 0 : index
    %c0_12 = arith.constant 0 : index
    %24 = vector.load %arg2[%c1, %c0_11, %c0_12] : memref<2x128x256xbf16, #tpu.memory_space<vmem>>, vector<1x128x256xbf16>
    %25 = vector.shape_cast %24 : vector<1x128x256xbf16> to vector<128x256xbf16>
    %cst_13 = arith.constant dense<0.000000e+00> : vector<128x256xf32>
    %26 = tpu.matmul %23, %25, %cst_13 {dimension_numbers = #tpu.dot_dimension_numbers<[1], [0], [0], [1], [0, 0, 1, 1], [], []>} : vector<128x128xbf16>, vector<128x256xbf16>, vector<128x256xf32> -> vector<128x256xf32>
    %c1_14 = arith.constant 1 : index
    %c0_15 = arith.constant 0 : index
    %c0_16 = arith.constant 0 : index
    %27 = vector.load %arg3[%c1_14, %c0_15, %c0_16] : memref<2x1x256xf32, #tpu.memory_space<vmem>>, vector<1x1x256xf32>
    %28 = vector.shape_cast %27 : vector<1x1x256xf32> to vector<1x256xf32>
    %29 = vector.broadcast %28 : vector<1x256xf32> to vector<128x256xf32>
    %30 = arith.addf %26, %29 : vector<128x256xf32>
    %31 = vector.extract_strided_slice %30 {offsets = [0, 0], sizes = [128, 128], strides = [1, 1]} : vector<128x256xf32> to vector<128x128xf32>
    %cst_17 = arith.constant 0.000000e+00 : f32
    %32 = vector.broadcast %cst_17 : f32 to vector<128x128xf32>
    %33 = arith.maximumf %31, %32 : vector<128x128xf32>
    %34 = vector.extract_strided_slice %30 {offsets = [0, 128], sizes = [128, 128], strides = [1, 1]} : vector<128x256xf32> to vector<128x128xf32>
    %cst_18 = arith.constant 5.000000e-01 : f32
    %35 = vector.broadcast %cst_18 : f32 to vector<128x128xf32>
    %36 = arith.mulf %35, %34 : vector<128x128xf32>
    %37 = math.tanh %36 : vector<128x128xf32>
    %cst_19 = arith.constant 1.000000e+00 : f32
    %38 = vector.broadcast %cst_19 : f32 to vector<128x128xf32>
    %39 = arith.addf %37, %38 : vector<128x128xf32>
    %cst_20 = arith.constant 5.000000e-01 : f32
    %40 = vector.broadcast %cst_20 : f32 to vector<128x128xf32>
    %41 = arith.mulf %40, %39 : vector<128x128xf32>
    %42 = arith.subf %33, %22 : vector<128x128xf32>
    %43 = arith.mulf %41, %42 : vector<128x128xf32>
    %44 = arith.addf %22, %43 : vector<128x128xf32>
    %c0_21 = arith.constant 0 : index
    %c0_22 = arith.constant 0 : index
    %45 = vector.load %arg4[%c0_21, %c0_22] : memref<128x128xf32, #tpu.memory_space<vmem>>, vector<128x128xf32>
    tpu.vector_store %arg4[%c0_21, %c0_22], %44 {strides = array<i32>} : memref<128x128xf32, #tpu.memory_space<vmem>>, vector<128x128xf32>,
    return
  }
  func.func @transform_0(%arg0: i32) -> (i32, i32) {
    %c0_i32 = arith.constant 0 : i32
    %c0_i32_0 = arith.constant 0 : i32
    return %arg0, %c0_i32 : i32, i32
  }
  func.func @transform_1(%arg0: i32) -> (i32, i32, i32) {
    %c0_i32 = arith.constant 0 : i32
    %c0_i32_0 = arith.constant 0 : i32
    %c0_i32_1 = arith.constant 0 : i32
    %c0_i32_2 = arith.constant 0 : i32
    return %c0_i32, %c0_i32_0, %c0_i32_1 : i32, i32, i32
  }
  func.func @transform_2(%arg0: i32) -> (i32, i32, i32) {
    %c0_i32 = arith.constant 0 : i32
    %c0_i32_0 = arith.constant 0 : i32
    %c0_i32_1 = arith.constant 0 : i32
    %c0_i32_2 = arith.constant 0 : i32
    return %c0_i32, %c0_i32_0, %c0_i32_1 : i32, i32, i32
  }
  func.func @transform_3(%arg0: i32) -> (i32, i32) {
    %c0_i32 = arith.constant 0 : i32
    %c0_i32_0 = arith.constant 0 : i32
    return %arg0, %c0_i32 : i32, i32
  }
}

</mosaic_0001>

<llo_original>
// kernel: tpu_custom_call.1
$region0: #{tpu_custom_call.1}
  #allocation0 [shape = 'u32[]', space=smem, size = 0x4, offset = 0x4, fixed_abs, tag = 'smem constant byte address 0x4 - core index']
  #allocation1 [shape = 'u32[72,128]{1,0:T(1,128)}', space=vmem, size = 0x9000, scoped, tag = 'internal scratch']
  %s0 = inlined_call_operand.hbm [shape: f32[128,128], index: 0, kind: input, shape index: {}]
  %s1 = inlined_call_operand.hbm [shape: bf16[2,128,256], index: 1, kind: input, shape index: {}]
  %s2 = inlined_call_operand.hbm [shape: f32[2,1,256], index: 2, kind: input, shape index: {}]
  %s3 = inlined_call_operand.hbm [shape: f32[128,128], index: 3, kind: output, shape index: {}]
  %s4 = sld [smem:[#allocation0]]
  $region34: #{tpu_custom_call.1} parent=0
    _
  %s6 = ssub.s32 1, %s4
  %s7 = scalar_select 0, %s6, %s4
  $region1: #{tpu_custom_call.1} parent=0
    #allocation2 [shape = 'u8[65536]{0}', space=vmem, size = 0x10000, scoped, tag = 'input window, operand 0, single buffered']
    #allocation3 [shape = 's32[1]{0}', space=sflag, size = 0x4, scoped, tag = 'scoped memory for tpu_custom_call.1']
    #allocation4 [shape = 's32[1]{0}', space=sflag, size = 0x4, scoped, tag = 'scoped memory for tpu_custom_call.1']
    #allocation5 [shape = 'u8[131072]{0}', space=vmem, size = 0x20000, scoped, tag = 'input window, operand 1, single buffered']
    #allocation6 [shape = 's32[1]{0}', space=sflag, size = 0x4, scoped, tag = 'scoped memory for tpu_custom_call.1']
    #allocation7 [shape = 'u8[2048]{0}', space=vmem, size = 0x800, scoped, tag = 'input window, operand 2, single buffered']
    #allocation8 [shape = 'u8[65536]{0}', space=vmem, size = 0x10000, scoped, tag = 'output window, operand 0, single buffered']
    %8 = vsyncpa [#allocation3], 0
    %9 = vsyncpa [#allocation6], 0
    %10 = vsyncpa [#allocation4], 0
    // Predicated region
    $region2: #{tpu_custom_call.1} parent=1 // pred_check
      _
    $region3: #{tpu_custom_call.1} parent=1 // pred_check_branch
      %12 = sbr.rel (0) target = $region5
    $region4: #{tpu_custom_call.1} parent=1 // pred_region
      %14 = vsyncadd [#allocation3], 0
      %s15 = sshll.u32 %s0, 4
      %s16 = int_to_ptr.hbm [resolvable:$true] %s15
      %s17 = sshll.u32 [#allocation2], 4
      %s18 = int_to_ptr.vmem [resolvable:$true] %s17
      %23 = dma.hbm_to_vmem [thread:$0]  %s16, 2048, %s18, [#allocation3], 128, 128, 8
    $region5: #{tpu_custom_call.1} parent=1 // pred_fallthru
      _
    // Predicated region
    $region6: #{tpu_custom_call.1} parent=1 // pred_check
      _
    $region7: #{tpu_custom_call.1} parent=1 // pred_check_branch
      %25 = sbr.rel (0) target = $region9
    $region8: #{tpu_custom_call.1} parent=1 // pred_region
      %27 = vsyncadd [#allocation6], 0
      %s28 = sshll.u32 %s1, 4
      %s29 = int_to_ptr.hbm [resolvable:$true] %s28
      %s30 = sshll.u32 [#allocation5], 4
      %s31 = int_to_ptr.vmem [resolvable:$true] %s30
      %36 = dma.hbm_to_vmem [thread:$0]  %s29, 4096, %s31, [#allocation6], 128, 128, 8
    $region9: #{tpu_custom_call.1} parent=1 // pred_fallthru
      _
    // Predicated region
    $region10: #{tpu_custom_call.1} parent=1 // pred_check
      _
    $region11: #{tpu_custom_call.1} parent=1 // pred_check_branch
      %38 = sbr.rel (0) target = $region13
    $region12: #{tpu_custom_call.1} parent=1 // pred_region
      %40 = vsyncadd [#allocation6], 0
      %s41 = sshll.u32 %s2, 4
      %s42 = int_to_ptr.hbm [resolvable:$true] %s41
      %s43 = sshll.u32 [#allocation7], 4
      %s44 = int_to_ptr.vmem [resolvable:$true] %s43
      %49 = dma.hbm_to_vmem [thread:$0]  %s42, 64, %s44, [#allocation6], 32, 32, 2
    $region13: #{tpu_custom_call.1} parent=1 // pred_fallthru
      _
    // Predicated region
    $region14: #{tpu_custom_call.1} parent=1 // pred_check
      _
    $region15: #{tpu_custom_call.1} parent=1 // pred_check_branch
      %51 = sbr.rel (0) target = $region17
    $region16: #{tpu_custom_call.1} parent=1 // pred_region
      %53 = dma.done [#allocation3], 2048
    $region17: #{tpu_custom_call.1} parent=1 // pred_fallthru
      _
    // Predicated region
    $region18: #{tpu_custom_call.1} parent=1 // pred_check
      _
    $region19: #{tpu_custom_call.1} parent=1 // pred_check_branch
      %55 = sbr.rel (0) target = $region21
    $region20: #{tpu_custom_call.1} parent=1 // pred_region
      %57 = dma.done [#allocation6], 4096
    $region21: #{tpu_custom_call.1} parent=1 // pred_fallthru
      _
    // Predicated region
    $region22: #{tpu_custom_call.1} parent=1 // pred_check
      _
    $region23: #{tpu_custom_call.1} parent=1 // pred_check_branch
      %59 = sbr.rel (0) target = $region25
    $region24: #{tpu_custom_call.1} parent=1 // pred_region
      %61 = dma.done [#allocation6], 64
    $region25: #{tpu_custom_call.1} parent=1 // pred_fallthru
      _
    %v62 = vld [vmem:[#allocation2] sm:$0xff]
    %v63 = vld [vmem:[#allocation2 + $0x8] sm:$0xff]
    %v64 = vld [vmem:[#allocation2 + $0x10] sm:$0xff]
    %v65 = vld [vmem:[#allocation2 + $0x18] sm:$0xff]
    %v66 = vld [vmem:[#allocation2 + $0x20] sm:$0xff]
    %v67 = vld [vmem:[#allocation2 + $0x28] sm:$0xff]
    %v68 = vld [vmem:[#allocation2 + $0x30] sm:$0xff]
    %v69 = vld [vmem:[#allocation2 + $0x38] sm:$0xff]
    %v70 = vld [vmem:[#allocation2 + $0x40] sm:$0xff]
    %v71 = vld [vmem:[#allocation2 + $0x48] sm:$0xff]
    %v72 = vld [vmem:[#allocation2 + $0x50] sm:$0xff]
    %v73 = vld [vmem:[#allocation2 + $0x58] sm:$0xff]
    %v74 = vld [vmem:[#allocation2 + $0x60] sm:$0xff]
    %v75 = vld [vmem:[#allocation2 + $0x68] sm:$0xff]
    %v76 = vld [vmem:[#allocation2 + $0x70] sm:$0xff]
    %v77 = vld [vmem:[#allocation2 + $0x78] sm:$0xff]
    %v78 = vpack.c.bf16 %v63, %v62
    %v79 = vpack.c.bf16 %v65, %v64
    %v80 = vpack.c.bf16 %v67, %v66
    %v81 = vpack.c.bf16 %v69, %v68
    %v82 = vpack.c.bf16 %v71, %v70
    %v83 = vpack.c.bf16 %v73, %v72
    %v84 = vpack.c.bf16 %v75, %v74
    %v85 = vpack.c.bf16 %v77, %v76
    %v86 = vld [vmem:[#allocation5] sm:$0xff]
    %v87 = vld [vmem:[#allocation5 + $0x8] sm:$0xff]
    %v88 = vld [vmem:[#allocation5 + $0x10] sm:$0xff]
    %v89 = vld [vmem:[#allocation5 + $0x18] sm:$0xff]
    %v90 = vld [vmem:[#allocation5 + $0x20] sm:$0xff]
    %v91 = vld [vmem:[#allocation5 + $0x28] sm:$0xff]
    %v92 = vld [vmem:[#allocation5 + $0x30] sm:$0xff]
    %v93 = vld [vmem:[#allocation5 + $0x38] sm:$0xff]
    %v94 = vld [vmem:[#allocation5 + $0x40] sm:$0xff]
    %v95 = vld [vmem:[#allocation5 + $0x48] sm:$0xff]
    %v96 = vld [vmem:[#allocation5 + $0x50] sm:$0xff]
    %v97 = vld [vmem:[#allocation5 + $0x58] sm:$0xff]
    %v98 = vld [vmem:[#allocation5 + $0x60] sm:$0xff]
    %v99 = vld [vmem:[#allocation5 + $0x68] sm:$0xff]
    %v100 = vld [vmem:[#allocation5 + $0x70] sm:$0xff]
    %v101 = vld [vmem:[#allocation5 + $0x78] sm:$0xff]
    %v102 = vld [vmem:[#allocation7] sm:$0x3]
    %v104 = vperm.slane %v102, 0
    %v105 = vperm.slane %v102, 1
    %v124 = vunpack.c.l.b16 %v86
    %v125 = vunpack.c.h.b16 %v86
    %v126 = vunpack.c.l.b16 %v87
    %v127 = vunpack.c.h.b16 %v87
    %v128 = vunpack.c.l.b16 %v88
    %v129 = vunpack.c.h.b16 %v88
    %v130 = vunpack.c.l.b16 %v89
    %v131 = vunpack.c.h.b16 %v89
    %v132 = vunpack.c.l.b16 %v90
    %v133 = vunpack.c.h.b16 %v90
    %v134 = vunpack.c.l.b16 %v91
    %v135 = vunpack.c.h.b16 %v91
    %v136 = vunpack.c.l.b16 %v92
    %v137 = vunpack.c.h.b16 %v92
    %v138 = vunpack.c.l.b16 %v93
    %v139 = vunpack.c.h.b16 %v93
    %v140 = vunpack.c.l.b16 %v94
    %v141 = vunpack.c.h.b16 %v94
    %v142 = vunpack.c.l.b16 %v95
    %v143 = vunpack.c.h.b16 %v95
    %v144 = vunpack.c.l.b16 %v96
    %v145 = vunpack.c.h.b16 %v96
    %v146 = vunpack.c.l.b16 %v97
    %v147 = vunpack.c.h.b16 %v97
    %v148 = vunpack.c.l.b16 %v98
    %v149 = vunpack.c.h.b16 %v98
    %v150 = vunpack.c.l.b16 %v99
    %v151 = vunpack.c.h.b16 %v99
    %v152 = vunpack.c.l.b16 %v100
    %v153 = vunpack.c.h.b16 %v100
    %v154 = vunpack.c.l.b16 %v101
    %v155 = vunpack.c.h.b16 %v101
    %v156 = vpack.c.b16 %v126, %v124
    %v157 = vpack.c.b16 %v127, %v125
    %v158 = vpack.c.b16 %v130, %v128
    %v159 = vpack.c.b16 %v131, %v129
    %v160 = vpack.c.b16 %v134, %v132
    %v161 = vpack.c.b16 %v135, %v133
    %v162 = vpack.c.b16 %v138, %v136
    %v163 = vpack.c.b16 %v139, %v137
    %v164 = vpack.c.b16 %v142, %v140
    %v165 = vpack.c.b16 %v143, %v141
    %v166 = vpack.c.b16 %v146, %v144
    %v167 = vpack.c.b16 %v147, %v145
    %v168 = vpack.c.b16 %v150, %v148
    %v169 = vpack.c.b16 %v151, %v149
    %v170 = vpack.c.b16 %v154, %v152
    %v171 = vpack.c.b16 %v155, %v153
    %188 = vmatpush.bf16.msra.mxu0 %v170
    %189 = vmatpush.bf16.msra.mxu0 %v168
    %190 = vmatpush.bf16.msra.mxu0 %v166
    %191 = vmatpush.bf16.msra.mxu0 %v164
    %192 = vmatpush.bf16.msra.mxu0 %v162
    %193 = vmatpush.bf16.msra.mxu0 %v160
    %194 = vmatpush.bf16.msra.mxu0 %v158
    %195 = vmatpush.bf16.msra.mxu0 %v156
    %196 = vmatmul.bf16.gmra.mxu0 %v78
    %v197 = vpop.f32.mrf.mxu0
    %v198 = vadd.f32 %v104, %v197
    %v199 = vpop.f32.mrf.mxu0
    %v200 = vadd.f32 %v104, %v199
    %201 = vmatmul.bf16.gmra.mxu0 %v79
    %v202 = vpop.f32.mrf.mxu0
    %v203 = vadd.f32 %v104, %v202
    %v204 = vpop.f32.mrf.mxu0
    %v205 = vadd.f32 %v104, %v204
    %206 = vmatmul.bf16.gmra.mxu0 %v80
    %v207 = vpop.f32.mrf.mxu0
    %v208 = vadd.f32 %v104, %v207
    %v209 = vpop.f32.mrf.mxu0
    %v210 = vadd.f32 %v104, %v209
    %211 = vmatmul.bf16.gmra.mxu0 %v81
    %v212 = vpop.f32.mrf.mxu0
    %v213 = vadd.f32 %v104, %v212
    %v214 = vpop.f32.mrf.mxu0
    %v215 = vadd.f32 %v104, %v214
    %216 = vmatmul.bf16.gmra.mxu0 %v82
    %v217 = vpop.f32.mrf.mxu0
    %v218 = vadd.f32 %v104, %v217
    %v219 = vpop.f32.mrf.mxu0
    %v220 = vadd.f32 %v104, %v219
    %221 = vmatmul.bf16.gmra.mxu0 %v83
    %v222 = vpop.f32.mrf.mxu0
    %v223 = vadd.f32 %v104, %v222
    %v224 = vpop.f32.mrf.mxu0
    %v225 = vadd.f32 %v104, %v224
    %226 = vmatmul.bf16.gmra.mxu0 %v84
    %v227 = vpop.f32.mrf.mxu0
    %v228 = vadd.f32 %v104, %v227
    %v229 = vpop.f32.mrf.mxu0
    %v230 = vadd.f32 %v104, %v229
    %231 = vmatmul.bf16.gmra.mxu0 %v85
    %v232 = vpop.f32.mrf.mxu0
    %v233 = vadd.f32 %v104, %v232
    %v234 = vpop.f32.mrf.mxu0
    %v235 = vadd.f32 %v104, %v234
    %236 = vdwg.mxu0
    %237 = vmatpush.bf16.msra.mxu0 %v171
    %238 = vmatpush.bf16.msra.mxu0 %v169
    %239 = vmatpush.bf16.msra.mxu0 %v167
    %240 = vmatpush.bf16.msra.mxu0 %v165
    %241 = vmatpush.bf16.msra.mxu0 %v163
    %242 = vmatpush.bf16.msra.mxu0 %v161
    %243 = vmatpush.bf16.msra.mxu0 %v159
    %244 = vmatpush.bf16.msra.mxu0 %v157
    %245 = vmatmul.bf16.gmra.mxu0 %v78
    %v246 = vpop.f32.mrf.mxu0
    %v247 = vadd.f32 %v105, %v246
    %v248 = vpop.f32.mrf.mxu0
    %v249 = vadd.f32 %v105, %v248
    %250 = vmatmul.bf16.gmra.mxu0 %v79
    %v251 = vpop.f32.mrf.mxu0
    %v252 = vadd.f32 %v105, %v251
    %v253 = vpop.f32.mrf.mxu0
    %v254 = vadd.f32 %v105, %v253
    %255 = vmatmul.bf16.gmra.mxu0 %v80
    %v256 = vpop.f32.mrf.mxu0
    %v257 = vadd.f32 %v105, %v256
    %v258 = vpop.f32.mrf.mxu0
    %v259 = vadd.f32 %v105, %v258
    %260 = vmatmul.bf16.gmra.mxu0 %v81
    %v261 = vpop.f32.mrf.mxu0
    %v262 = vadd.f32 %v105, %v261
    %v263 = vpop.f32.mrf.mxu0
    %v264 = vadd.f32 %v105, %v263
    %265 = vmatmul.bf16.gmra.mxu0 %v82
    %v266 = vpop.f32.mrf.mxu0
    %v267 = vadd.f32 %v105, %v266
    %v268 = vpop.f32.mrf.mxu0
    %v269 = vadd.f32 %v105, %v268
    %270 = vmatmul.bf16.gmra.mxu0 %v83
    %v271 = vpop.f32.mrf.mxu0
    %v272 = vadd.f32 %v105, %v271
    %v273 = vpop.f32.mrf.mxu0
    %v274 = vadd.f32 %v105, %v273
    %275 = vmatmul.bf16.gmra.mxu0 %v84
    %v276 = vpop.f32.mrf.mxu0
    %v277 = vadd.f32 %v105, %v276
    %v278 = vpop.f32.mrf.mxu0
    %v279 = vadd.f32 %v105, %v278
    %280 = vmatmul.bf16.gmra.mxu0 %v85
    %v281 = vpop.f32.mrf.mxu0
    %v282 = vadd.f32 %v105, %v281
    %v283 = vpop.f32.mrf.mxu0
    %v284 = vadd.f32 %v105, %v283
    %285 = vdwg.mxu0
    %v286 = vmax.f32 %v198, 0.0
    %v287 = vmax.f32 %v200, 0.0
    %v288 = vmax.f32 %v203, 0.0
    %v289 = vmax.f32 %v205, 0.0
    %v290 = vmax.f32 %v208, 0.0
    %v291 = vmax.f32 %v210, 0.0
    %v292 = vmax.f32 %v213, 0.0
    %v293 = vmax.f32 %v215, 0.0
    %v294 = vmax.f32 %v218, 0.0
    %v295 = vmax.f32 %v220, 0.0
    %v296 = vmax.f32 %v223, 0.0
    %v297 = vmax.f32 %v225, 0.0
    %v298 = vmax.f32 %v228, 0.0
    %v299 = vmax.f32 %v230, 0.0
    %v300 = vmax.f32 %v233, 0.0
    %v301 = vmax.f32 %v235, 0.0
    %v302 = vmul.f32 %v247, 0.5
    %v303 = vmul.f32 %v249, 0.5
    %v304 = vmul.f32 %v252, 0.5
    %v305 = vmul.f32 %v254, 0.5
    %v306 = vmul.f32 %v257, 0.5
    %v307 = vmul.f32 %v259, 0.5
    %v308 = vmul.f32 %v262, 0.5
    %v309 = vmul.f32 %v264, 0.5
    %v310 = vmul.f32 %v267, 0.5
    %v311 = vmul.f32 %v269, 0.5
    %v312 = vmul.f32 %v272, 0.5
    %v313 = vmul.f32 %v274, 0.5
    %v314 = vmul.f32 %v277, 0.5
    %v315 = vmul.f32 %v279, 0.5
    %v316 = vmul.f32 %v282, 0.5
    %v317 = vmul.f32 %v284, 0.5
    %v318 = vtanh.pop %v302
    %v319 = vtanh.pop %v303
    %v320 = vtanh.pop %v304
    %v321 = vtanh.pop %v305
    %v322 = vtanh.pop %v306
    %v323 = vtanh.pop %v307
    %v324 = vtanh.pop %v308
    %v325 = vtanh.pop %v309
    %v326 = vtanh.pop %v310
    %v327 = vtanh.pop %v311
    %v328 = vtanh.pop %v312
    %v329 = vtanh.pop %v313
    %v330 = vtanh.pop %v314
    %v331 = vtanh.pop %v315
    %v332 = vtanh.pop %v316
    %v333 = vtanh.pop %v317
    %v334 = vadd.f32 %v318, 1.0
    %v335 = vadd.f32 %v319, 1.0
    %v336 = vadd.f32 %v320, 1.0
    %v337 = vadd.f32 %v321, 1.0
    %v338 = vadd.f32 %v322, 1.0
    %v339 = vadd.f32 %v323, 1.0
    %v340 = vadd.f32 %v324, 1.0
    %v341 = vadd.f32 %v325, 1.0
    %v342 = vadd.f32 %v326, 1.0
    %v343 = vadd.f32 %v327, 1.0
    %v344 = vadd.f32 %v328, 1.0
    %v345 = vadd.f32 %v329, 1.0
    %v346 = vadd.f32 %v330, 1.0
    %v347 = vadd.f32 %v331, 1.0
    %v348 = vadd.f32 %v332, 1.0
    %v349 = vadd.f32 %v333, 1.0
    %v350 = vmul.f32 %v334, 0.5
    %v351 = vmul.f32 %v335, 0.5
    %v352 = vmul.f32 %v336, 0.5
    %v353 = vmul.f32 %v337, 0.5
    %v354 = vmul.f32 %v338, 0.5
    %v355 = vmul.f32 %v339, 0.5
    %v356 = vmul.f32 %v340, 0.5
    %v357 = vmul.f32 %v341, 0.5
    %v358 = vmul.f32 %v342, 0.5
    %v359 = vmul.f32 %v343, 0.5
    %v360 = vmul.f32 %v344, 0.5
    %v361 = vmul.f32 %v345, 0.5
    %v362 = vmul.f32 %v346, 0.5
    %v363 = vmul.f32 %v347, 0.5
    %v364 = vmul.f32 %v348, 0.5
    %v365 = vmul.f32 %v349, 0.5
    %v366 = vsub.f32 %v286, %v62
    %v367 = vsub.f32 %v287, %v63
    %v368 = vsub.f32 %v288, %v64
    %v369 = vsub.f32 %v289, %v65
    %v370 = vsub.f32 %v290, %v66
    %v371 = vsub.f32 %v291, %v67
    %v372 = vsub.f32 %v292, %v68
    %v373 = vsub.f32 %v293, %v69
    %v374 = vsub.f32 %v294, %v70
    %v375 = vsub.f32 %v295, %v71
    %v376 = vsub.f32 %v296, %v72
    %v377 = vsub.f32 %v297, %v73
    %v378 = vsub.f32 %v298, %v74
    %v379 = vsub.f32 %v299, %v75
    %v380 = vsub.f32 %v300, %v76
    %v381 = vsub.f32 %v301, %v77
    %v382 = vmul.f32 %v350, %v366
    %v383 = vmul.f32 %v351, %v367
    %v384 = vmul.f32 %v352, %v368
    %v385 = vmul.f32 %v353, %v369
    %v386 = vmul.f32 %v354, %v370
    %v387 = vmul.f32 %v355, %v371
    %v388 = vmul.f32 %v356, %v372
    %v389 = vmul.f32 %v357, %v373
    %v390 = vmul.f32 %v358, %v374
    %v391 = vmul.f32 %v359, %v375
    %v392 = vmul.f32 %v360, %v376
    %v393 = vmul.f32 %v361, %v377
    %v394 = vmul.f32 %v362, %v378
    %v395 = vmul.f32 %v363, %v379
    %v396 = vmul.f32 %v364, %v380
    %v397 = vmul.f32 %v365, %v381
    %v398 = vadd.f32 %v62, %v382
    %v399 = vadd.f32 %v63, %v383
    %v400 = vadd.f32 %v64, %v384
    %v401 = vadd.f32 %v65, %v385
    %v402 = vadd.f32 %v66, %v386
    %v403 = vadd.f32 %v67, %v387
    %v404 = vadd.f32 %v68, %v388
    %v405 = vadd.f32 %v69, %v389
    %v406 = vadd.f32 %v70, %v390
    %v407 = vadd.f32 %v71, %v391
    %v408 = vadd.f32 %v72, %v392
    %v409 = vadd.f32 %v73, %v393
    %v410 = vadd.f32 %v74, %v394
    %v411 = vadd.f32 %v75, %v395
    %v412 = vadd.f32 %v76, %v396
    %v413 = vadd.f32 %v77, %v397
    %v414 = vpack.c.bf16 %v399, %v398
    %v415 = vpack.c.bf16 %v401, %v400
    %v416 = vpack.c.bf16 %v403, %v402
    %v417 = vpack.c.bf16 %v405, %v404
    %v418 = vpack.c.bf16 %v407, %v406
    %v419 = vpack.c.bf16 %v409, %v408
    %v420 = vpack.c.bf16 %v411, %v410
    %v421 = vpack.c.bf16 %v413, %v412
    %s422 = scalar_lea.vmem [#allocation5], 128
    %v423 = vld [vmem:[%s422] sm:$0xff]
    %v424 = vld [vmem:[%s422 + $0x8] sm:$0xff]
    %v425 = vld [vmem:[%s422 + $0x10] sm:$0xff]
    %v426 = vld [vmem:[%s422 + $0x18] sm:$0xff]
    %v427 = vld [vmem:[%s422 + $0x20] sm:$0xff]
    %v428 = vld [vmem:[%s422 + $0x28] sm:$0xff]
    %v429 = vld [vmem:[%s422 + $0x30] sm:$0xff]
    %v430 = vld [vmem:[%s422 + $0x38] sm:$0xff]
    %v431 = vld [vmem:[%s422 + $0x40] sm:$0xff]
    %v432 = vld [vmem:[%s422 + $0x48] sm:$0xff]
    %v433 = vld [vmem:[%s422 + $0x50] sm:$0xff]
    %v434 = vld [vmem:[%s422 + $0x58] sm:$0xff]
    %v435 = vld [vmem:[%s422 + $0x60] sm:$0xff]
    %v436 = vld [vmem:[%s422 + $0x68] sm:$0xff]
    %v437 = vld [vmem:[%s422 + $0x70] sm:$0xff]
    %v438 = vld [vmem:[%s422 + $0x78] sm:$0xff]
    %s439 = scalar_lea.vmem [#allocation7], 2
    %v440 = vld [vmem:[%s439] sm:$0x3]
    %v442 = vperm.slane %v440, 0
    %v443 = vperm.slane %v440, 1
    %v462 = vunpack.c.l.b16 %v423
    %v463 = vunpack.c.h.b16 %v423
    %v464 = vunpack.c.l.b16 %v424
    %v465 = vunpack.c.h.b16 %v424
    %v466 = vunpack.c.l.b16 %v425
    %v467 = vunpack.c.h.b16 %v425
    %v468 = vunpack.c.l.b16 %v426
    %v469 = vunpack.c.h.b16 %v426
    %v470 = vunpack.c.l.b16 %v427
    %v471 = vunpack.c.h.b16 %v427
    %v472 = vunpack.c.l.b16 %v428
    %v473 = vunpack.c.h.b16 %v428
    %v474 = vunpack.c.l.b16 %v429
    %v475 = vunpack.c.h.b16 %v429
    %v476 = vunpack.c.l.b16 %v430
    %v477 = vunpack.c.h.b16 %v430
    %v478 = vunpack.c.l.b16 %v431
    %v479 = vunpack.c.h.b16 %v431
    %v480 = vunpack.c.l.b16 %v432
    %v481 = vunpack.c.h.b16 %v432
    %v482 = vunpack.c.l.b16 %v433
    %v483 = vunpack.c.h.b16 %v433
    %v484 = vunpack.c.l.b16 %v434
    %v485 = vunpack.c.h.b16 %v434
    %v486 = vunpack.c.l.b16 %v435
    %v487 = vunpack.c.h.b16 %v435
    %v488 = vunpack.c.l.b16 %v436
    %v489 = vunpack.c.h.b16 %v436
    %v490 = vunpack.c.l.b16 %v437
    %v491 = vunpack.c.h.b16 %v437
    %v492 = vunpack.c.l.b16 %v438
    %v493 = vunpack.c.h.b16 %v438
    %v494 = vpack.c.b16 %v464, %v462
    %v495 = vpack.c.b16 %v465, %v463
    %v496 = vpack.c.b16 %v468, %v466
    %v497 = vpack.c.b16 %v469, %v467
    %v498 = vpack.c.b16 %v472, %v470
    %v499 = vpack.c.b16 %v473, %v471
    %v500 = vpack.c.b16 %v476, %v474
    %v501 = vpack.c.b16 %v477, %v475
    %v502 = vpack.c.b16 %v480, %v478
    %v503 = vpack.c.b16 %v481, %v479
    %v504 = vpack.c.b16 %v484, %v482
    %v505 = vpack.c.b16 %v485, %v483
    %v506 = vpack.c.b16 %v488, %v486
    %v507 = vpack.c.b16 %v489, %v487
    %v508 = vpack.c.b16 %v492, %v490
    %v509 = vpack.c.b16 %v493, %v491
    %526 = vmatpush.bf16.msra.mxu0 %v508
    %527 = vmatpush.bf16.msra.mxu0 %v506
    %528 = vmatpush.bf16.msra.mxu0 %v504
    %529 = vmatpush.bf16.msra.mxu0 %v502
    %530 = vmatpush.bf16.msra.mxu0 %v500
    %531 = vmatpush.bf16.msra.mxu0 %v498
    %532 = vmatpush.bf16.msra.mxu0 %v496
    %533 = vmatpush.bf16.msra.mxu0 %v494
    %534 = vmatmul.bf16.gmra.mxu0 %v414
    %v535 = vpop.f32.mrf.mxu0
    %v536 = vadd.f32 %v442, %v535
    %v537 = vpop.f32.mrf.mxu0
    %v538 = vadd.f32 %v442, %v537
    %539 = vmatmul.bf16.gmra.mxu0 %v415
    %v540 = vpop.f32.mrf.mxu0
    %v541 = vadd.f32 %v442, %v540
    %v542 = vpop.f32.mrf.mxu0
    %v543 = vadd.f32 %v442, %v542
    %544 = vmatmul.bf16.gmra.mxu0 %v416
    %v545 = vpop.f32.mrf.mxu0
    %v546 = vadd.f32 %v442, %v545
    %v547 = vpop.f32.mrf.mxu0
    %v548 = vadd.f32 %v442, %v547
    %549 = vmatmul.bf16.gmra.mxu0 %v417
    %v550 = vpop.f32.mrf.mxu0
    %v551 = vadd.f32 %v442, %v550
    %v552 = vpop.f32.mrf.mxu0
    %v553 = vadd.f32 %v442, %v552
    %554 = vmatmul.bf16.gmra.mxu0 %v418
    %v555 = vpop.f32.mrf.mxu0
    %v556 = vadd.f32 %v442, %v555
    %v557 = vpop.f32.mrf.mxu0
    %v558 = vadd.f32 %v442, %v557
    %559 = vmatmul.bf16.gmra.mxu0 %v419
    %v560 = vpop.f32.mrf.mxu0
    %v561 = vadd.f32 %v442, %v560
    %v562 = vpop.f32.mrf.mxu0
    %v563 = vadd.f32 %v442, %v562
    %564 = vmatmul.bf16.gmra.mxu0 %v420
    %v565 = vpop.f32.mrf.mxu0
    %v566 = vadd.f32 %v442, %v565
    %v567 = vpop.f32.mrf.mxu0
    %v568 = vadd.f32 %v442, %v567
    %569 = vmatmul.bf16.gmra.mxu0 %v421
    %v570 = vpop.f32.mrf.mxu0
    %v571 = vadd.f32 %v442, %v570
    %v572 = vpop.f32.mrf.mxu0
    %v573 = vadd.f32 %v442, %v572
    %574 = vdwg.mxu0
    %575 = vmatpush.bf16.msra.mxu0 %v509
    %576 = vmatpush.bf16.msra.mxu0 %v507
    %577 = vmatpush.bf16.msra.mxu0 %v505
    %578 = vmatpush.bf16.msra.mxu0 %v503
    %579 = vmatpush.bf16.msra.mxu0 %v501
    %580 = vmatpush.bf16.msra.mxu0 %v499
    %581 = vmatpush.bf16.msra.mxu0 %v497
    %582 = vmatpush.bf16.msra.mxu0 %v495
    %583 = vmatmul.bf16.gmra.mxu0 %v414
    %v584 = vpop.f32.mrf.mxu0
    %v585 = vadd.f32 %v443, %v584
    %v586 = vpop.f32.mrf.mxu0
    %v587 = vadd.f32 %v443, %v586
    %588 = vmatmul.bf16.gmra.mxu0 %v415
    %v589 = vpop.f32.mrf.mxu0
    %v590 = vadd.f32 %v443, %v589
    %v591 = vpop.f32.mrf.mxu0
    %v592 = vadd.f32 %v443, %v591
    %593 = vmatmul.bf16.gmra.mxu0 %v416
    %v594 = vpop.f32.mrf.mxu0
    %v595 = vadd.f32 %v443, %v594
    %v596 = vpop.f32.mrf.mxu0
    %v597 = vadd.f32 %v443, %v596
    %598 = vmatmul.bf16.gmra.mxu0 %v417
    %v599 = vpop.f32.mrf.mxu0
    %v600 = vadd.f32 %v443, %v599
    %v601 = vpop.f32.mrf.mxu0
    %v602 = vadd.f32 %v443, %v601
    %603 = vmatmul.bf16.gmra.mxu0 %v418
    %v604 = vpop.f32.mrf.mxu0
    %v605 = vadd.f32 %v443, %v604
    %v606 = vpop.f32.mrf.mxu0
    %v607 = vadd.f32 %v443, %v606
    %608 = vmatmul.bf16.gmra.mxu0 %v419
    %v609 = vpop.f32.mrf.mxu0
    %v610 = vadd.f32 %v443, %v609
    %v611 = vpop.f32.mrf.mxu0
    %v612 = vadd.f32 %v443, %v611
    %613 = vmatmul.bf16.gmra.mxu0 %v420
    %v614 = vpop.f32.mrf.mxu0
    %v615 = vadd.f32 %v443, %v614
    %v616 = vpop.f32.mrf.mxu0
    %v617 = vadd.f32 %v443, %v616
    %618 = vmatmul.bf16.gmra.mxu0 %v421
    %v619 = vpop.f32.mrf.mxu0
    %v620 = vadd.f32 %v443, %v619
    %v621 = vpop.f32.mrf.mxu0
    %v622 = vadd.f32 %v443, %v621
    %623 = vdwg.mxu0
    %v624 = vmax.f32 %v536, 0.0
    %v625 = vmax.f32 %v538, 0.0
    %v626 = vmax.f32 %v541, 0.0
    %v627 = vmax.f32 %v543, 0.0
    %v628 = vmax.f32 %v546, 0.0
    %v629 = vmax.f32 %v548, 0.0
    %v630 = vmax.f32 %v551, 0.0
    %v631 = vmax.f32 %v553, 0.0
    %v632 = vmax.f32 %v556, 0.0
    %v633 = vmax.f32 %v558, 0.0
    %v634 = vmax.f32 %v561, 0.0
    %v635 = vmax.f32 %v563, 0.0
    %v636 = vmax.f32 %v566, 0.0
    %v637 = vmax.f32 %v568, 0.0
    %v638 = vmax.f32 %v571, 0.0
    %v639 = vmax.f32 %v573, 0.0
    %v640 = vmul.f32 %v585, 0.5
    %v641 = vmul.f32 %v587, 0.5
    %v642 = vmul.f32 %v590, 0.5
    %v643 = vmul.f32 %v592, 0.5
    %v644 = vmul.f32 %v595, 0.5
    %v645 = vmul.f32 %v597, 0.5
    %v646 = vmul.f32 %v600, 0.5
    %v647 = vmul.f32 %v602, 0.5
    %v648 = vmul.f32 %v605, 0.5
    %v649 = vmul.f32 %v607, 0.5
    %v650 = vmul.f32 %v610, 0.5
    %v651 = vmul.f32 %v612, 0.5
    %v652 = vmul.f32 %v615, 0.5
    %v653 = vmul.f32 %v617, 0.5
    %v654 = vmul.f32 %v620, 0.5
    %v655 = vmul.f32 %v622, 0.5
    %v656 = vtanh.pop %v640
    %v657 = vtanh.pop %v641
    %v658 = vtanh.pop %v642
    %v659 = vtanh.pop %v643
    %v660 = vtanh.pop %v644
    %v661 = vtanh.pop %v645
    %v662 = vtanh.pop %v646
    %v663 = vtanh.pop %v647
    %v664 = vtanh.pop %v648
    %v665 = vtanh.pop %v649
    %v666 = vtanh.pop %v650
    %v667 = vtanh.pop %v651
    %v668 = vtanh.pop %v652
    %v669 = vtanh.pop %v653
    %v670 = vtanh.pop %v654
    %v671 = vtanh.pop %v655
    %v672 = vadd.f32 %v656, 1.0
    %v673 = vadd.f32 %v657, 1.0
    %v674 = vadd.f32 %v658, 1.0
    %v675 = vadd.f32 %v659, 1.0
    %v676 = vadd.f32 %v660, 1.0
    %v677 = vadd.f32 %v661, 1.0
    %v678 = vadd.f32 %v662, 1.0
    %v679 = vadd.f32 %v663, 1.0
    %v680 = vadd.f32 %v664, 1.0
    %v681 = vadd.f32 %v665, 1.0
    %v682 = vadd.f32 %v666, 1.0
    %v683 = vadd.f32 %v667, 1.0
    %v684 = vadd.f32 %v668, 1.0
    %v685 = vadd.f32 %v669, 1.0
    %v686 = vadd.f32 %v670, 1.0
    %v687 = vadd.f32 %v671, 1.0
    %v688 = vmul.f32 %v672, 0.5
    %v689 = vmul.f32 %v673, 0.5
    %v690 = vmul.f32 %v674, 0.5
    %v691 = vmul.f32 %v675, 0.5
    %v692 = vmul.f32 %v676, 0.5
    %v693 = vmul.f32 %v677, 0.5
    %v694 = vmul.f32 %v678, 0.5
    %v695 = vmul.f32 %v679, 0.5
    %v696 = vmul.f32 %v680, 0.5
    %v697 = vmul.f32 %v681, 0.5
    %v698 = vmul.f32 %v682, 0.5
    %v699 = vmul.f32 %v683, 0.5
    %v700 = vmul.f32 %v684, 0.5
    %v701 = vmul.f32 %v685, 0.5
    %v702 = vmul.f32 %v686, 0.5
    %v703 = vmul.f32 %v687, 0.5
    %v704 = vsub.f32 %v624, %v398
    %v705 = vsub.f32 %v625, %v399
    %v706 = vsub.f32 %v626, %v400
    %v707 = vsub.f32 %v627, %v401
    %v708 = vsub.f32 %v628, %v402
    %v709 = vsub.f32 %v629, %v403
    %v710 = vsub.f32 %v630, %v404
    %v711 = vsub.f32 %v631, %v405
    %v712 = vsub.f32 %v632, %v406
    %v713 = vsub.f32 %v633, %v407
    %v714 = vsub.f32 %v634, %v408
    %v715 = vsub.f32 %v635, %v409
    %v716 = vsub.f32 %v636, %v410
    %v717 = vsub.f32 %v637, %v411
    %v718 = vsub.f32 %v638, %v412
    %v719 = vsub.f32 %v639, %v413
    %v720 = vmul.f32 %v688, %v704
    %v721 = vmul.f32 %v689, %v705
    %v722 = vmul.f32 %v690, %v706
    %v723 = vmul.f32 %v691, %v707
    %v724 = vmul.f32 %v692, %v708
    %v725 = vmul.f32 %v693, %v709
    %v726 = vmul.f32 %v694, %v710
    %v727 = vmul.f32 %v695, %v711
    %v728 = vmul.f32 %v696, %v712
    %v729 = vmul.f32 %v697, %v713
    %v730 = vmul.f32 %v698, %v714
    %v731 = vmul.f32 %v699, %v715
    %v732 = vmul.f32 %v700, %v716
    %v733 = vmul.f32 %v701, %v717
    %v734 = vmul.f32 %v702, %v718
    %v735 = vmul.f32 %v703, %v719
    %v736 = vadd.f32 %v398, %v720
    %v737 = vadd.f32 %v399, %v721
    %v738 = vadd.f32 %v400, %v722
    %v739 = vadd.f32 %v401, %v723
    %v740 = vadd.f32 %v402, %v724
    %v741 = vadd.f32 %v403, %v725
    %v742 = vadd.f32 %v404, %v726
    %v743 = vadd.f32 %v405, %v727
    %v744 = vadd.f32 %v406, %v728
    %v745 = vadd.f32 %v407, %v729
    %v746 = vadd.f32 %v408, %v730
    %v747 = vadd.f32 %v409, %v731
    %v748 = vadd.f32 %v410, %v732
    %v749 = vadd.f32 %v411, %v733
    %v750 = vadd.f32 %v412, %v734
    %v751 = vadd.f32 %v413, %v735
    %752 = vst [vmem:[#allocation8] sm:$0xff] %v736
    %753 = vst [vmem:[#allocation8 + $0x8] sm:$0xff] %v737
    %754 = vst [vmem:[#allocation8 + $0x10] sm:$0xff] %v738
    %755 = vst [vmem:[#allocation8 + $0x18] sm:$0xff] %v739
    %756 = vst [vmem:[#allocation8 + $0x20] sm:$0xff] %v740
    %757 = vst [vmem:[#allocation8 + $0x28] sm:$0xff] %v741
    %758 = vst [vmem:[#allocation8 + $0x30] sm:$0xff] %v742
    %759 = vst [vmem:[#allocation8 + $0x38] sm:$0xff] %v743
    %760 = vst [vmem:[#allocation8 + $0x40] sm:$0xff] %v744
    %761 = vst [vmem:[#allocation8 + $0x48] sm:$0xff] %v745
    %762 = vst [vmem:[#allocation8 + $0x50] sm:$0xff] %v746
    %763 = vst [vmem:[#allocation8 + $0x58] sm:$0xff] %v747
    %764 = vst [vmem:[#allocation8 + $0x60] sm:$0xff] %v748
    %765 = vst [vmem:[#allocation8 + $0x68] sm:$0xff] %v749
    %766 = vst [vmem:[#allocation8 + $0x70] sm:$0xff] %v750
    %767 = vst [vmem:[#allocation8 + $0x78] sm:$0xff] %v751
    // Predicated region
    $region26: #{tpu_custom_call.1} parent=1 // pred_check
      _
    $region27: #{tpu_custom_call.1} parent=1 // pred_check_branch
      %769 = sbr.rel (0) target = $region29
    $region28: #{tpu_custom_call.1} parent=1 // pred_region
      %771 = vsyncadd [#allocation4], 0
      %s772 = sshll.u32 [#allocation8], 4
      %s773 = int_to_ptr.vmem [resolvable:$true] %s772
      %s774 = sshll.u32 %s3, 4
      %s775 = int_to_ptr.hbm [resolvable:$true] %s774
      %780 = dma.vmem_to_hbm [thread:$0]  %s773, 2048, %s775, [#allocation4], 128, 128, 8
    $region29: #{tpu_custom_call.1} parent=1 // pred_fallthru
      _
    // Predicated region
    $region30: #{tpu_custom_call.1} parent=1 // pred_check
      _
    $region31: #{tpu_custom_call.1} parent=1 // pred_check_branch
      %782 = sbr.rel (0) target = $region33
    $region32: #{tpu_custom_call.1} parent=1 // pred_region
      %784 = dma.done [#allocation4], 2048
    $region33: #{tpu_custom_call.1} parent=1 // pred_fallthru
      _
    %785 = vsyncpa [#allocation3], 1
    %786 = vsyncpa [#allocation6], 1
    %787 = vsyncpa [#allocation4], 1

</llo_original>
